<compile_context>
chip_gen: v7x
topology: tpu7x:2x2x1
jax: 0.10.0
libtpu: 0.0.40
codegen_flags: <defaults>
</compile_context>

<pallas_src>
import math

import numpy as np

import jax
import jax.numpy as jnp
from jax.experimental import pallas as pl
from jax.experimental.pallas import tpu as pltpu

# ---------------- config (small, consistent with the module) ----------------
B = 2                 # batch
S = 8                 # sequence length
D = 32                # embed_dim
H = 4                 # n_heads
DH = D // H           # head_dim = 8
FFN_MULT = 4
HF = D * FFN_MULT     # ffn hidden = 128
BS = B * S            # flattened token count = 16
HB = H * BS           # head-blocked row count = 64
QKV_W = 3 * 128       # padded fused-QKV width: q@[0:32], k@[128:160], v@[256:288]
EPS = 1e-6
NEG = -1000000000.0

# ---- constant-slab row layout (f32, width 384) ----
R_COS = 0             # rows [  0, 16): RoPE cos table             (BS, D)
R_CM1 = 16            # rows [ 16, 32): coeff paired with roll(-1) (BS, D)
R_CP1 = 32            # rows [ 32, 48): coeff paired with roll(+1) (BS, D)
R_MASK = 48           # rows [ 48,112): additive attn mask         (HB, BS)
R_HMASK = 112         # rows [112,176): per-head 0/1 column mask   (HB, D)
R_BANK = 176          # rows [176,182): g1, g2, bqkv, bo, bgu, b2  (one row each)
SLAB_ROWS = 184
SLAB_W = 384

# ---- weight-slab row layout (bf16, width 384) ----
WR_QKV = 0            # rows [  0, 32): Wqkv (padded)   (D, 384)
WR_GU = 32            # rows [ 32, 64): [Wgate | Wup]   (D, 256)
WR_O = 64             # rows [ 64, 96): Wo              (D, D)
WR_2 = 96             # rows [ 96,224): W2              (HF, D)
WSLAB_ROWS = 224


# ---------------------------------------------------------------------------
# kernel
# ---------------------------------------------------------------------------
def encoder_layer_kernel(x_ref, c_ref, w_ref, out_ref):
    x = x_ref[...]                                           # (BS, D) f32

    # --- constants (one lane-dense slab) ---
    cos_t = c_ref[R_COS:R_COS + BS, 0:D]
    c_m1 = c_ref[R_CM1:R_CM1 + BS, 0:D]
    c_p1 = c_ref[R_CP1:R_CP1 + BS, 0:D]
    mask_add = c_ref[R_MASK:R_MASK + HB, 0:BS]               # (HB, BS) additive mask
    hmask = c_ref[R_HMASK:R_HMASK + HB, 0:D]                 # (HB, D) per-head 0/1
    g1 = c_ref[R_BANK + 0:R_BANK + 1, 0:D]
    g2 = c_ref[R_BANK + 1:R_BANK + 2, 0:D]
    bqkv = c_ref[R_BANK + 2:R_BANK + 3, 0:QKV_W]
    bo = c_ref[R_BANK + 3:R_BANK + 4, 0:D]
    bgu = c_ref[R_BANK + 4:R_BANK + 5, 0:2 * HF]
    b2 = c_ref[R_BANK + 5:R_BANK + 6, 0:D]

    # --- weights (one bf16 slab; slices are sublane/lane aligned) ---
    wqkv = w_ref[WR_QKV:WR_QKV + D, 0:QKV_W]                 # (D, 384)
    wgu = w_ref[WR_GU:WR_GU + D, 0:2 * HF]                   # (D, 256)
    wo = w_ref[WR_O:WR_O + D, 0:D]                           # (D, D)
    w2 = w_ref[WR_2:WR_2 + HF, 0:D]                          # (HF, D)

    bf = jnp.bfloat16

    def rmsnorm(t, g):
        return t * jax.lax.rsqrt(jnp.mean(t * t, axis=-1, keepdims=True) + EPS) * g

    def rope(t):
        # interleaved-pair rotation (torch view_as_complex convention):
        #   out[:, 2i]   = t[:, 2i]*cos - t[:, 2i+1]*sin
        #   out[:, 2i+1] = t[:, 2i+1]*cos + t[:, 2i]*sin
        # coefficients are zero at the unused parity so head-boundary wrap never leaks.
        return (t * cos_t
                + pltpu.roll(t, D - 1, axis=1) * c_m1        # partner t[:, l+1] at even l
                + pltpu.roll(t, 1, axis=1) * c_p1)           # partner t[:, l-1] at odd l

    # ---------------- attention ----------------
    nx = rmsnorm(x, g1)
    qkv = jnp.dot(nx.astype(bf), wqkv,
                  preferred_element_type=jnp.float32) + bqkv          # (BS, 384) f32
    q = rope(qkv[:, 0:D])                 # 1/sqrt(DH) already folded into Wq/bq
    k = rope(qkv[:, 128:128 + D])
    v = qkv[:, 256:256 + D]

    # head-blocked scores: row block h of q4 holds q masked to head h's lanes, so a
    # single (HB,D)x(BS,D)^T matmul produces all H*BS*BS scores (no per-head slicing,
    # no stacks, no transposes).
    q4 = jnp.concatenate([q] * H, axis=0) * hmask                      # (HB, D)
    s = jax.lax.dot_general(q4.astype(bf), k.astype(bf),
                            (((1,), (1,)), ((), ())),
                            preferred_element_type=jnp.float32)        # (HB, BS)
    s = s + mask_add
    s = s - jnp.max(s, axis=-1, keepdims=True)
    p = jnp.exp(s)
    p = p * pl.reciprocal(jnp.sum(p, axis=-1, keepdims=True), approx=True)

    # context for all heads in one matmul; masking confines head h's output to its own
    # column band, so the head "concat" is a sum of sublane-aligned row blocks.
    pv = jnp.dot(p.astype(bf), v.astype(bf),
                 preferred_element_type=jnp.float32) * hmask           # (HB, D)
    o = pv[0:BS, :]
    for h in range(1, H):
        o = o + pv[h * BS:(h + 1) * BS, :]                             # (BS, D)

    x1 = x + jnp.dot(o.astype(bf), wo, preferred_element_type=jnp.float32) + bo

    # ---------------- SwiGLU FFN ----------------
    nx2 = rmsnorm(x1, g2)
    gu = jnp.dot(nx2.astype(bf), wgu,
                 preferred_element_type=jnp.float32) + bgu             # (BS, 2*HF)
    gate = gu[:, 0:HF]                    # split lands on the 128-lane boundary
    up = gu[:, HF:2 * HF]
    gated = gate * jax.nn.sigmoid(gate) * up
    ffn = jnp.dot(gated.astype(bf), w2, preferred_element_type=jnp.float32) + b2

    out_ref[...] = (x1 + ffn).astype(out_ref.dtype)


# ---------------------------------------------------------------------------
# one-time (hoisted) constant assembly
# ---------------------------------------------------------------------------
def build_operands(params, mask):
    """Host-side, one-time packing of all per-call constants: fused/padded weights,
    RoPE tables, flattened additive attention mask, per-head masks, gamma/bias bank."""
    (g1, wq, bq, wk, bk, wv, bv, wo, bo, g2, wg, bg, wu, bu, w2, b2) = [
        np.asarray(p, np.float32) for p in params]

    # fold 1/sqrt(head_dim) into the Q projection (RoPE is linear -> commutes)
    scale = 1.0 / math.sqrt(DH)
    wq = wq * scale
    bq = bq * scale

    # fused, 128-lane-aligned QKV weight/bias (q@0, k@128, v@256)
    wqkv = np.zeros((D, QKV_W), np.float32)
    bqkv = np.zeros((1, QKV_W), np.float32)
    wqkv[:, 0:D], wqkv[:, 128:128 + D], wqkv[:, 256:256 + D] = wq, wk, wv
    bqkv[:, 0:D], bqkv[:, 128:128 + D], bqkv[:, 256:256 + D] = bq, bk, bv

    # ---- f32 constant slab ----
    slab = np.zeros((SLAB_ROWS, SLAB_W), np.float32)

    # RoPE tables over the flattened token axis (torch StandardRoPE: interleaved pairs,
    # theta_j = 10000 ** (-2*(2j)/head_dim)); per-head pattern repeated across D lanes.
    pos = (np.arange(BS) % S).astype(np.float32)
    lane = np.arange(D)
    pair = (lane % DH) // 2
    theta = 10000.0 ** (-2.0 * (2.0 * pair) / DH)
    ang = pos[:, None] * theta[None, :]
    cos_t, sin_t = np.cos(ang), np.sin(ang)
    even = (lane % 2 == 0)[None, :]
    slab[R_COS:R_COS + BS, 0:D] = cos_t
    slab[R_CM1:R_CM1 + BS, 0:D] = np.where(even, -sin_t, 0.0)
    slab[R_CP1:R_CP1 + BS, 0:D] = np.where(even, 0.0, sin_t)

    # additive attention mask over the flattened (B*S) token axis
    # (-1e9 on padded keys, torch masked_fill semantics, and on cross-batch positions),
    # replicated once per head block.
    add = np.where(np.asarray(mask) == 0, NEG, 0.0).astype(np.float32)  # (B, S, S)
    mflat = np.full((BS, BS), NEG, np.float32)
    for b in range(B):
        mflat[b * S:(b + 1) * S, b * S:(b + 1) * S] = add[b]
    slab[R_MASK:R_MASK + HB, 0:BS] = np.tile(mflat, (H, 1))

    # per-head 0/1 column masks (row block h selects lanes h*DH:(h+1)*DH)
    hmask = np.zeros((HB, D), np.float32)
    for h in range(H):
        hmask[h * BS:(h + 1) * BS, h * DH:(h + 1) * DH] = 1.0
    slab[R_HMASK:R_HMASK + HB, 0:D] = hmask

    # gamma / bias bank
    slab[R_BANK + 0, 0:D] = g1[0]
    slab[R_BANK + 1, 0:D] = g2[0]
    slab[R_BANK + 2, 0:QKV_W] = bqkv[0]
    slab[R_BANK + 3, 0:D] = bo[0]
    slab[R_BANK + 4, 0:HF] = bg[0]
    slab[R_BANK + 4, HF:2 * HF] = bu[0]
    slab[R_BANK + 5, 0:D] = b2[0]

    # ---- bf16 weight slab (MXU operands pre-cast; kernel accumulates in f32) ----
    wslab = np.zeros((WSLAB_ROWS, SLAB_W), np.float32)
    wslab[WR_QKV:WR_QKV + D, 0:QKV_W] = wqkv
    wslab[WR_GU:WR_GU + D, 0:HF] = wg
    wslab[WR_GU:WR_GU + D, HF:2 * HF] = wu
    wslab[WR_O:WR_O + D, 0:D] = wo
    wslab[WR_2:WR_2 + HF, 0:D] = w2

    return jnp.asarray(slab), jnp.asarray(wslab, dtype=jnp.bfloat16)


# ---------------------------------------------------------------------------
# hot path: jitted, only the pallas_call (plus free reshapes)
# ---------------------------------------------------------------------------
@jax.jit
def _encoder_layer_call(x, const_slab, w_slab):
    out_flat = pl.pallas_call(
        encoder_layer_kernel,
        out_shape=jax.ShapeDtypeStruct((BS, D), jnp.float32),
    )(x.reshape(BS, D), const_slab, w_slab)
    return out_flat.reshape(B, S, D)


def encoder_layer(x, operands):
    """x: (B, S, D) f32; operands: build_operands(params, mask)."""
    const_slab, w_slab = operands
    return _encoder_layer_call(x, const_slab, w_slab)


# ---------------------------------------------------------------------------
# params + pure-JAX reference (mirrors the torch layer, eval mode) for a sanity check
# ---------------------------------------------------------------------------
def make_params(key):
    ks = jax.random.split(key, 16)

    def lin(kw, kb, fan_in, fan_out):
        lim = 1.0 / math.sqrt(fan_in)
        w = jax.random.uniform(kw, (fan_in, fan_out), jnp.float32, -lim, lim)
        b = jax.random.uniform(kb, (1, fan_out), jnp.float32, -lim, lim)
        return w, b

    wq, bq = lin(ks[0], ks[1], D, D)
    wk, bk = lin(ks[2], ks[3], D, D)
    wv, bv = lin(ks[4], ks[5], D, D)
    wo, bo = lin(ks[6], ks[7], D, D)
    wg, bg = lin(ks[8], ks[9], D, HF)
    wu, bu = lin(ks[10], ks[11], D, HF)
    w2, b2 = lin(ks[12], ks[13], HF, D)
    g1 = 1.0 + 0.1 * jax.random.normal(ks[14], (1, D), jnp.float32)
    g2 = 1.0 + 0.1 * jax.random.normal(ks[15], (1, D), jnp.float32)
    return (g1, wq, bq, wk, bk, wv, bv, wo, bo, g2, wg, bg, wu, bu, w2, b2)


def reference_layer(x, mask, params):
    """Pure-JAX mirror of the PyTorch StandardTransformerEncoderLayer (eval mode)."""
    (g1, wq, bq, wk, bk, wv, bv, wo, bo, g2, wg, bg, wu, bu, w2, b2) = params
    hp = "highest"

    def rms(t, g):
        return t * jax.lax.rsqrt(jnp.mean(t * t, axis=-1, keepdims=True) + EPS) * g

    def rope(t):  # t: (B, H, S, DH) — torch StandardRoPE (interleaved complex pairs)
        pos = jnp.arange(S, dtype=jnp.float32)
        theta = 10000.0 ** (-2.0 * jnp.arange(0, DH, 2, dtype=jnp.float32) / DH)
        ang = pos[:, None] * theta[None, :]                      # (S, DH//2)
        c, s_ = jnp.cos(ang), jnp.sin(ang)
        tr = t.reshape(*t.shape[:-1], DH // 2, 2)
        re, im = tr[..., 0], tr[..., 1]
        out = jnp.stack([re * c - im * s_, re * s_ + im * c], axis=-1)
        return out.reshape(t.shape)

    nx = rms(x, g1)
    q = jnp.transpose((jnp.dot(nx, wq, precision=hp) + bq).reshape(B, S, H, DH), (0, 2, 1, 3))
    k = jnp.transpose((jnp.dot(nx, wk, precision=hp) + bk).reshape(B, S, H, DH), (0, 2, 1, 3))
    v = jnp.transpose((jnp.dot(nx, wv, precision=hp) + bv).reshape(B, S, H, DH), (0, 2, 1, 3))
    q, k = rope(q), rope(k)
    sc = jnp.einsum('bhqd,bhkd->bhqk', q, k, precision=hp) / math.sqrt(DH)
    sc = jnp.where(mask[:, None, :, :] == 0, NEG, sc)
    w = jax.nn.softmax(sc, axis=-1)
    o = jnp.einsum('bhqk,bhkd->bhqd', w, v, precision=hp)
    o = jnp.transpose(o, (0, 2, 1, 3)).reshape(B, S, D)
    x1 = x + jnp.dot(o, wo, precision=hp) + bo
    nx2 = rms(x1, g2)
    gate = jnp.dot(nx2, wg, precision=hp) + bg
    up = jnp.dot(nx2, wu, precision=hp) + bu
    ffn = jnp.dot(gate * jax.nn.sigmoid(gate) * up, w2, precision=hp) + b2
    return x1 + ffn


if __name__ == "__main__":
    key = jax.random.PRNGKey(0)
    kx, kp = jax.random.split(key)

    x = jax.random.normal(kx, (B, S, D), dtype=jnp.float32)

    # padding-style mask: batch 0 attends to all 8 keys, batch 1 only to the first 6
    lengths = jnp.array([S, S - 2], dtype=jnp.int32)
    key_pos = jnp.arange(S)[None, None, :]
    mask = (key_pos < lengths[:, None, None]).astype(jnp.float32)     # (B, 1, S)
    mask = jnp.broadcast_to(mask, (B, S, S))

    params = make_params(kp)

    # one-time hoisted setup (not on the hot path)
    operands = build_operands(params, mask)

    out = encoder_layer(x, operands)
    jax.block_until_ready(out)
    assert out.shape == (B, S, D)

    # sanity check vs. a 'highest'-precision f32 reference of the torch layer.
    # (kernel uses bf16 MXU operands + pl.reciprocal(approx=True) in the softmax,
    #  per the perf review -> tolerance reflects that.)
    ref = reference_layer(x, mask, params)
    err = float(jnp.max(jnp.abs(out - ref)))
    assert err < 5e-2, err

    # TODO(synk): dropout layers are identity here (eval-mode forward only).
    print("KERNEL_OK")
</pallas_src>

<mosaic_0001>
module attributes {stable_mosaic.version = 11 : i64} {
  func.func @encoder_layer_kernel(%arg0: memref<16x32xf32, #tpu.memory_space<vmem>>, %arg1: memref<184x384xf32, #tpu.memory_space<vmem>>, %arg2: memref<224x384xbf16, #tpu.memory_space<vmem>>, %arg3: memref<16x32xf32, #tpu.memory_space<vmem>>) attributes {dimension_semantics = [], scalar_prefetch = 0 : i64, scratch_operands = 0 : i64, tpu.core_type = #tpu.core_type<tc>} {
    %c0 = arith.constant 0 : index
    %c0_0 = arith.constant 0 : index
    %0 = vector.load %arg0[%c0, %c0_0] : memref<16x32xf32, #tpu.memory_space<vmem>>, vector<16x32xf32>
    %c0_1 = arith.constant 0 : index
    %c0_2 = arith.constant 0 : index
    %1 = vector.load %arg1[%c0_1, %c0_2] : memref<184x384xf32, #tpu.memory_space<vmem>>, vector<16x32xf32>
    %c16 = arith.constant 16 : index
    %c0_3 = arith.constant 0 : index
    %2 = vector.load %arg1[%c16, %c0_3] : memref<184x384xf32, #tpu.memory_space<vmem>>, vector<16x32xf32>
    %c32 = arith.constant 32 : index
    %c0_4 = arith.constant 0 : index
    %3 = vector.load %arg1[%c32, %c0_4] : memref<184x384xf32, #tpu.memory_space<vmem>>, vector<16x32xf32>
    %c48 = arith.constant 48 : index
    %c0_5 = arith.constant 0 : index
    %4 = vector.load %arg1[%c48, %c0_5] : memref<184x384xf32, #tpu.memory_space<vmem>>, vector<64x16xf32>
    %c112 = arith.constant 112 : index
    %c0_6 = arith.constant 0 : index
    %5 = vector.load %arg1[%c112, %c0_6] : memref<184x384xf32, #tpu.memory_space<vmem>>, vector<64x32xf32>
    %c176 = arith.constant 176 : index
    %c0_7 = arith.constant 0 : index
    %6 = vector.load %arg1[%c176, %c0_7] : memref<184x384xf32, #tpu.memory_space<vmem>>, vector<1x32xf32>
    %c177 = arith.constant 177 : index
    %c0_8 = arith.constant 0 : index
    %7 = vector.load %arg1[%c177, %c0_8] : memref<184x384xf32, #tpu.memory_space<vmem>>, vector<1x32xf32>
    %c178 = arith.constant 178 : index
    %c0_9 = arith.constant 0 : index
    %8 = vector.load %arg1[%c178, %c0_9] : memref<184x384xf32, #tpu.memory_space<vmem>>, vector<1x384xf32>
    %c179 = arith.constant 179 : index
    %c0_10 = arith.constant 0 : index
    %9 = vector.load %arg1[%c179, %c0_10] : memref<184x384xf32, #tpu.memory_space<vmem>>, vector<1x32xf32>
    %c180 = arith.constant 180 : index
    %c0_11 = arith.constant 0 : index
    %10 = vector.load %arg1[%c180, %c0_11] : memref<184x384xf32, #tpu.memory_space<vmem>>, vector<1x256xf32>
    %c181 = arith.constant 181 : index
    %c0_12 = arith.constant 0 : index
    %11 = vector.load %arg1[%c181, %c0_12] : memref<184x384xf32, #tpu.memory_space<vmem>>, vector<1x32xf32>
    %c0_13 = arith.constant 0 : index
    %c0_14 = arith.constant 0 : index
    %12 = vector.load %arg2[%c0_13, %c0_14] : memref<224x384xbf16, #tpu.memory_space<vmem>>, vector<32x384xbf16>
    %c32_15 = arith.constant 32 : index
    %c0_16 = arith.constant 0 : index
    %13 = vector.load %arg2[%c32_15, %c0_16] : memref<224x384xbf16, #tpu.memory_space<vmem>>, vector<32x256xbf16>
    %c64 = arith.constant 64 : index
    %c0_17 = arith.constant 0 : index
    %14 = vector.load %arg2[%c64, %c0_17] : memref<224x384xbf16, #tpu.memory_space<vmem>>, vector<32x32xbf16>
    %c96 = arith.constant 96 : index
    %c0_18 = arith.constant 0 : index
    %15 = vector.load %arg2[%c96, %c0_18] : memref<224x384xbf16, #tpu.memory_space<vmem>>, vector<128x32xbf16>
    %16 = arith.mulf %0, %0 : vector<16x32xf32>
    %cst = arith.constant dense<0.000000e+00> : vector<16xf32>
    %17 = vector.multi_reduction <add>, %16, %cst [1] : vector<16x32xf32> to vector<16xf32>
    %18 = vector.shape_cast %17 : vector<16xf32> to vector<16x1xf32>
    %cst_19 = arith.constant 3.200000e+01 : f32
    %19 = vector.broadcast %cst_19 : f32 to vector<16x1xf32>
    %20 = arith.divf %18, %19 : vector<16x1xf32>
    %cst_20 = arith.constant 9.99999997E-7 : f32
    %21 = vector.broadcast %cst_20 : f32 to vector<16x1xf32>
    %22 = arith.addf %20, %21 : vector<16x1xf32>
    %23 = math.rsqrt %22 : vector<16x1xf32>
    %24 = vector.broadcast %23 : vector<16x1xf32> to vector<16x32xf32>
    %25 = arith.mulf %0, %24 : vector<16x32xf32>
    %26 = vector.broadcast %6 : vector<1x32xf32> to vector<16x32xf32>
    %27 = arith.mulf %25, %26 : vector<16x32xf32>
    %28 = arith.truncf %27 : vector<16x32xf32> to vector<16x32xbf16>
    %cst_21 = arith.constant dense<0.000000e+00> : vector<16x384xf32>
    %29 = tpu.matmul %28, %12, %cst_21 {dimension_numbers = #tpu.dot_dimension_numbers<[1], [0], [0], [1], [0, 0, 1, 1], [], []>} : vector<16x32xbf16>, vector<32x384xbf16>, vector<16x384xf32> -> vector<16x384xf32>
    %30 = vector.broadcast %8 : vector<1x384xf32> to vector<16x384xf32>
    %31 = arith.addf %29, %30 : vector<16x384xf32>
    %32 = vector.extract_strided_slice %31 {offsets = [0, 0], sizes = [16, 32], strides = [1, 1]} : vector<16x384xf32> to vector<16x32xf32>
    %33 = arith.mulf %32, %1 : vector<16x32xf32>
    %c31_i32 = arith.constant 31 : i32
    %34 = tpu.dynamic_rotate %32 by %c31_i32 dim 1 : vector<16x32xf32>, i32 -> vector<16x32xf32>
    %35 = arith.mulf %34, %2 : vector<16x32xf32>
    %36 = arith.addf %33, %35 : vector<16x32xf32>
    %c1_i32 = arith.constant 1 : i32
    %37 = tpu.dynamic_rotate %32 by %c1_i32 dim 1 : vector<16x32xf32>, i32 -> vector<16x32xf32>
    %38 = arith.mulf %37, %3 : vector<16x32xf32>
    %39 = arith.addf %36, %38 : vector<16x32xf32>
    %40 = vector.extract_strided_slice %31 {offsets = [0, 128], sizes = [16, 32], strides = [1, 1]} : vector<16x384xf32> to vector<16x32xf32>
    %41 = arith.mulf %40, %1 : vector<16x32xf32>
    %c31_i32_22 = arith.constant 31 : i32
    %42 = tpu.dynamic_rotate %40 by %c31_i32_22 dim 1 : vector<16x32xf32>, i32 -> vector<16x32xf32>
    %43 = arith.mulf %42, %2 : vector<16x32xf32>
    %44 = arith.addf %41, %43 : vector<16x32xf32>
    %c1_i32_23 = arith.constant 1 : i32
    %45 = tpu.dynamic_rotate %40 by %c1_i32_23 dim 1 : vector<16x32xf32>, i32 -> vector<16x32xf32>
    %46 = arith.mulf %45, %3 : vector<16x32xf32>
    %47 = arith.addf %44, %46 : vector<16x32xf32>
    %48 = vector.extract_strided_slice %31 {offsets = [0, 256], sizes = [16, 32], strides = [1, 1]} : vector<16x384xf32> to vector<16x32xf32>
    %49 = tpu.concatenate %39, %39, %39, %39 in 0 : vector<16x32xf32>, vector<16x32xf32>, vector<16x32xf32>, vector<16x32xf32> -> vector<64x32xf32>
    %50 = arith.mulf %49, %5 : vector<64x32xf32>
    %51 = arith.truncf %50 : vector<64x32xf32> to vector<64x32xbf16>
    %52 = arith.truncf %47 : vector<16x32xf32> to vector<16x32xbf16>
    %cst_24 = arith.constant dense<0.000000e+00> : vector<64x16xf32>
    %53 = tpu.matmul %51, %52, %cst_24 {dimension_numbers = #tpu.dot_dimension_numbers<[1], [1], [0], [0], [0, 0, 1, 0], [], []>} : vector<64x32xbf16>, vector<16x32xbf16>, vector<64x16xf32> -> vector<64x16xf32>
    %54 = arith.addf %53, %4 : vector<64x16xf32>
    %cst_25 = arith.constant dense<0xFF800000> : vector<64xf32>
    %55 = vector.multi_reduction <maximumf>, %54, %cst_25 [1] : vector<64x16xf32> to vector<64xf32>
    %56 = vector.shape_cast %55 : vector<64xf32> to vector<64x1xf32>
    %57 = vector.broadcast %56 : vector<64x1xf32> to vector<64x16xf32>
    %58 = arith.subf %54, %57 : vector<64x16xf32>
    %59 = math.exp %58 : vector<64x16xf32>
    %cst_26 = arith.constant dense<0.000000e+00> : vector<64xf32>
    %60 = vector.multi_reduction <add>, %59, %cst_26 [1] : vector<64x16xf32> to vector<64xf32>
    %61 = vector.shape_cast %60 : vector<64xf32> to vector<64x1xf32>
    %62 = tpu.reciprocal %61 {approx = true} : vector<64x1xf32> -> vector<64x1xf32>
    %63 = vector.broadcast %62 : vector<64x1xf32> to vector<64x16xf32>
    %64 = arith.mulf %59, %63 : vector<64x16xf32>
    %65 = arith.truncf %64 : vector<64x16xf32> to vector<64x16xbf16>
    %66 = arith.truncf %48 : vector<16x32xf32> to vector<16x32xbf16>
    %cst_27 = arith.constant dense<0.000000e+00> : vector<64x32xf32>
    %67 = tpu.matmul %65, %66, %cst_27 {dimension_numbers = #tpu.dot_dimension_numbers<[1], [0], [0], [1], [0, 0, 1, 1], [], []>} : vector<64x16xbf16>, vector<16x32xbf16>, vector<64x32xf32> -> vector<64x32xf32>
    %68 = arith.mulf %67, %5 : vector<64x32xf32>
    %69 = vector.extract_strided_slice %68 {offsets = [0, 0], sizes = [16, 32], strides = [1, 1]} : vector<64x32xf32> to vector<16x32xf32>
    %70 = vector.extract_strided_slice %68 {offsets = [16, 0], sizes = [16, 32], strides = [1, 1]} : vector<64x32xf32> to vector<16x32xf32>
    %71 = arith.addf %69, %70 : vector<16x32xf32>
    %72 = vector.extract_strided_slice %68 {offsets = [32, 0], sizes = [16, 32], strides = [1, 1]} : vector<64x32xf32> to vector<16x32xf32>
    %73 = arith.addf %71, %72 : vector<16x32xf32>
    %74 = vector.extract_strided_slice %68 {offsets = [48, 0], sizes = [16, 32], strides = [1, 1]} : vector<64x32xf32> to vector<16x32xf32>
    %75 = arith.addf %73, %74 : vector<16x32xf32>
    %76 = arith.truncf %75 : vector<16x32xf32> to vector<16x32xbf16>
    %cst_28 = arith.constant dense<0.000000e+00> : vector<16x32xf32>
    %77 = tpu.matmul %76, %14, %cst_28 {dimension_numbers = #tpu.dot_dimension_numbers<[1], [0], [0], [1], [0, 0, 1, 1], [], []>} : vector<16x32xbf16>, vector<32x32xbf16>, vector<16x32xf32> -> vector<16x32xf32>
    %78 = arith.addf %0, %77 : vector<16x32xf32>
    %79 = vector.broadcast %9 : vector<1x32xf32> to vector<16x32xf32>
    %80 = arith.addf %78, %79 : vector<16x32xf32>
    %81 = arith.mulf %80, %80 : vector<16x32xf32>
    %cst_29 = arith.constant dense<0.000000e+00> : vector<16xf32>
    %82 = vector.multi_reduction <add>, %81, %cst_29 [1] : vector<16x32xf32> to vector<16xf32>
    %83 = vector.shape_cast %82 : vector<16xf32> to vector<16x1xf32>
    %cst_30 = arith.constant 3.200000e+01 : f32
    %84 = vector.broadcast %cst_30 : f32 to vector<16x1xf32>
    %85 = arith.divf %83, %84 : vector<16x1xf32>
    %cst_31 = arith.constant 9.99999997E-7 : f32
    %86 = vector.broadcast %cst_31 : f32 to vector<16x1xf32>
    %87 = arith.addf %85, %86 : vector<16x1xf32>
    %88 = math.rsqrt %87 : vector<16x1xf32>
    %89 = vector.broadcast %88 : vector<16x1xf32> to vector<16x32xf32>
    %90 = arith.mulf %80, %89 : vector<16x32xf32>
    %91 = vector.broadcast %7 : vector<1x32xf32> to vector<16x32xf32>
    %92 = arith.mulf %90, %91 : vector<16x32xf32>
    %93 = arith.truncf %92 : vector<16x32xf32> to vector<16x32xbf16>
    %cst_32 = arith.constant dense<0.000000e+00> : vector<16x256xf32>
    %94 = tpu.matmul %93, %13, %cst_32 {dimension_numbers = #tpu.dot_dimension_numbers<[1], [0], [0], [1], [0, 0, 1, 1], [], []>} : vector<16x32xbf16>, vector<32x256xbf16>, vector<16x256xf32> -> vector<16x256xf32>
    %95 = vector.broadcast %10 : vector<1x256xf32> to vector<16x256xf32>
    %96 = arith.addf %94, %95 : vector<16x256xf32>
    %97 = vector.extract_strided_slice %96 {offsets = [0, 0], sizes = [16, 128], strides = [1, 1]} : vector<16x256xf32> to vector<16x128xf32>
    %98 = vector.extract_strided_slice %96 {offsets = [0, 128], sizes = [16, 128], strides = [1, 1]} : vector<16x256xf32> to vector<16x128xf32>
    %99 = arith.negf %97 : vector<16x128xf32>
    %100 = math.exp %99 : vector<16x128xf32>
    %cst_33 = arith.constant 1.000000e+00 : f32
    %101 = vector.broadcast %cst_33 : f32 to vector<16x128xf32>
    %102 = arith.addf %101, %100 : vector<16x128xf32>
    %103 = arith.divf %101, %102 : vector<16x128xf32>
    %104 = arith.mulf %97, %103 : vector<16x128xf32>
    %105 = arith.mulf %104, %98 : vector<16x128xf32>
    %106 = arith.truncf %105 : vector<16x128xf32> to vector<16x128xbf16>
    %cst_34 = arith.constant dense<0.000000e+00> : vector<16x32xf32>
    %107 = tpu.matmul %106, %15, %cst_34 {dimension_numbers = #tpu.dot_dimension_numbers<[1], [0], [0], [1], [0, 0, 1, 1], [], []>} : vector<16x128xbf16>, vector<128x32xbf16>, vector<16x32xf32> -> vector<16x32xf32>
    %108 = vector.broadcast %11 : vector<1x32xf32> to vector<16x32xf32>
    %109 = arith.addf %107, %108 : vector<16x32xf32>
    %110 = arith.addf %80, %109 : vector<16x32xf32>
    %c0_35 = arith.constant 0 : index
    %c0_36 = arith.constant 0 : index
    %111 = vector.load %arg3[%c0_35, %c0_36] : memref<16x32xf32, #tpu.memory_space<vmem>>, vector<16x32xf32>
    tpu.vector_store %arg3[%c0_35, %c0_36], %110 {strides = array<i32>} : memref<16x32xf32, #tpu.memory_space<vmem>>, vector<16x32xf32>,
    return
  }
}

</mosaic_0001>

<llo_original>
// kernel: _encoder_layer_call.1
$region0: #{_encoder_layer_call.1}
  #allocation0 [shape = 'u32[]', space=smem, size = 0x4, offset = 0x4, fixed_abs, tag = 'smem constant byte address 0x4 - core index']
  #allocation1 [shape = 'u32[144,128]{1,0:T(1,128)}', space=vmem, size = 0x12000, scoped, tag = 'internal scratch']
  %s0 = inlined_call_operand.hbm [shape: f32[16,32], index: 0, kind: input, shape index: {}]
  %s1 = inlined_call_operand.hbm [shape: f32[184,384], index: 1, kind: input, shape index: {}]
  %s2 = inlined_call_operand.hbm [shape: bf16[224,384], index: 2, kind: input, shape index: {}]
  %s3 = inlined_call_operand.hbm [shape: f32[16,32], index: 3, kind: output, shape index: {}]
  %s4 = sld [smem:[#allocation0]]
  $region34: #{_encoder_layer_call.1} parent=0
    _
  %s6 = ssub.s32 1, %s4
  %s7 = scalar_select 0, %s6, %s4
  $region1: #{_encoder_layer_call.1} parent=0
    #allocation2 [shape = 'u8[8192]{0}', space=vmem, size = 0x2000, scoped, tag = 'input window, operand 0, single buffered']
    #allocation3 [shape = 's32[1]{0}', space=sflag, size = 0x4, scoped, tag = 'scoped memory for _encoder_layer_call.1']
    #allocation4 [shape = 's32[1]{0}', space=sflag, size = 0x4, scoped, tag = 'scoped memory for _encoder_layer_call.1']
    #allocation5 [shape = 'u8[282624]{0}', space=vmem, size = 0x45000, scoped, tag = 'input window, operand 1, single buffered']
    #allocation6 [shape = 's32[1]{0}', space=sflag, size = 0x4, scoped, tag = 'scoped memory for _encoder_layer_call.1']
    #allocation7 [shape = 'u8[172032]{0}', space=vmem, size = 0x2a000, scoped, tag = 'input window, operand 2, single buffered']
    #allocation8 [shape = 'u8[8192]{0}', space=vmem, size = 0x2000, scoped, tag = 'output window, operand 0, single buffered']
    %8 = vsyncpa [#allocation3], 0
    %9 = vsyncpa [#allocation6], 0
    %10 = vsyncpa [#allocation4], 0
    // Predicated region
    $region2: #{_encoder_layer_call.1} parent=1 // pred_check
      _
    $region3: #{_encoder_layer_call.1} parent=1 // pred_check_branch
      %12 = sbr.rel (0) target = $region5
    $region4: #{_encoder_layer_call.1} parent=1 // pred_region
      %s14 = ssub.s32 256, 256
      %15 = vsyncadd [#allocation3], %s14
      %s16 = sshll.u32 [#allocation2], 4
      %s17 = int_to_ptr.vmem [resolvable:$true] %s16
      %22 = dma.hbm_to_vmem [thread:$0]  %s0, 256, %s17, [#allocation3], 128, 128, 8
    $region5: #{_encoder_layer_call.1} parent=1 // pred_fallthru
      _
    // Predicated region
    $region6: #{_encoder_layer_call.1} parent=1 // pred_check
      _
    $region7: #{_encoder_layer_call.1} parent=1 // pred_check_branch
      %24 = sbr.rel (0) target = $region9
    $region8: #{_encoder_layer_call.1} parent=1 // pred_region
      %s26 = ssub.s32 8832, 8832
      %27 = vsyncadd [#allocation6], %s26
      %s28 = sshll.u32 [#allocation5], 4
      %s29 = int_to_ptr.vmem [resolvable:$true] %s28
      %34 = dma.hbm_to_vmem [thread:$0]  %s1, 8832, %s29, [#allocation6], 384, 384, 24
    $region9: #{_encoder_layer_call.1} parent=1 // pred_fallthru
      _
    // Predicated region
    $region10: #{_encoder_layer_call.1} parent=1 // pred_check
      _
    $region11: #{_encoder_layer_call.1} parent=1 // pred_check_branch
      %36 = sbr.rel (0) target = $region13
    $region12: #{_encoder_layer_call.1} parent=1 // pred_region
      %s38 = ssub.s32 5376, 5376
      %39 = vsyncadd [#allocation6], %s38
      %s40 = sshll.u32 [#allocation7], 4
      %s41 = int_to_ptr.vmem [resolvable:$true] %s40
      %46 = dma.hbm_to_vmem [thread:$0]  %s2, 5376, %s41, [#allocation6], 192, 192, 12
    $region13: #{_encoder_layer_call.1} parent=1 // pred_fallthru
      _
    // Predicated region
    $region14: #{_encoder_layer_call.1} parent=1 // pred_check
      _
    $region15: #{_encoder_layer_call.1} parent=1 // pred_check_branch
      %48 = sbr.rel (0) target = $region17
    $region16: #{_encoder_layer_call.1} parent=1 // pred_region
      %49 = dma.done [#allocation3], 256
    $region17: #{_encoder_layer_call.1} parent=1 // pred_fallthru
      _
    // Predicated region
    $region18: #{_encoder_layer_call.1} parent=1 // pred_check
      _
    $region19: #{_encoder_layer_call.1} parent=1 // pred_check_branch
      %51 = sbr.rel (0) target = $region21
    $region20: #{_encoder_layer_call.1} parent=1 // pred_region
      %52 = dma.done [#allocation6], 8832
    $region21: #{_encoder_layer_call.1} parent=1 // pred_fallthru
      _
    // Predicated region
    $region22: #{_encoder_layer_call.1} parent=1 // pred_check
      _
    $region23: #{_encoder_layer_call.1} parent=1 // pred_check_branch
      %54 = sbr.rel (0) target = $region25
    $region24: #{_encoder_layer_call.1} parent=1 // pred_region
      %55 = dma.done [#allocation6], 5376
    $region25: #{_encoder_layer_call.1} parent=1 // pred_fallthru
      _
    %v57 = vld [vmem:[#allocation2] sm:$0xff]
    %v58 = vld [vmem:[#allocation2 + $0x8] sm:$0xff]
    %v59 = vld [vmem:[#allocation5] sm:$0xff]
    %v60 = vld [vmem:[#allocation5 + $0x18] sm:$0xff]
    %v61 = vld [vmem:[#allocation5 + $0x30] sm:$0xff]
    %v62 = vld [vmem:[#allocation5 + $0x48] sm:$0xff]
    %v63 = vld [vmem:[#allocation5 + $0x60] sm:$0xff]
    %v64 = vld [vmem:[#allocation5 + $0x78] sm:$0xff]
    %v65 = vld [vmem:[#allocation5 + $0x90] sm:$0xff]
    %v66 = vld [vmem:[#allocation5 + $0xa8] sm:$0xff]
    %v67 = vld [vmem:[#allocation5 + $0xc0] sm:$0xff]
    %v68 = vld [vmem:[#allocation5 + $0xd8] sm:$0xff]
    %v69 = vld [vmem:[#allocation5 + $0xf0] sm:$0xff]
    %v70 = vld [vmem:[#allocation5 + $0x108] sm:$0xff]
    %v71 = vld [vmem:[#allocation5 + $0x120] sm:$0xff]
    %v72 = vld [vmem:[#allocation5 + $0x138] sm:$0xff]
    %v73 = vld [vmem:[#allocation5 + $0x150] sm:$0xff]
    %v74 = vld [vmem:[#allocation5 + $0x168] sm:$0xff]
    %v75 = vld [vmem:[#allocation5 + $0x180] sm:$0xff]
    %v76 = vld [vmem:[#allocation5 + $0x198] sm:$0xff]
    %v77 = vld [vmem:[#allocation5 + $0x1b0] sm:$0xff]
    %v78 = vld [vmem:[#allocation5 + $0x1c8] sm:$0xff]
    %v79 = vld [vmem:[#allocation5 + $0x1e0] sm:$0xff]
    %v80 = vld [vmem:[#allocation5 + $0x1f8] sm:$0xff]
    %v81 = vld [vmem:[#allocation5 + $0x210] ss:$0 sm:$0xff]
    %v82 = vld [vmem:[#allocation5 + $0x211] ss:$0 sm:$0xff]
    %s83 = scalar_lea.vmem [#allocation5], 530
    %v84 = vld [vmem:[%s83] ss:$8 sm:$0x7]
    %v85 = vld [vmem:[#allocation5 + $0x213] ss:$0 sm:$0xff]
    %s86 = scalar_lea.vmem [#allocation5], 532
    %v87 = vld [vmem:[%s86] ss:$8 sm:$0x3]
    %v88 = vld [vmem:[#allocation5 + $0x215] ss:$0 sm:$0xff]
    %v89 = vld [vmem:[#allocation7] sm:$0xff]
    %v90 = vld [vmem:[#allocation7 + $0x8] sm:$0xf]
    %v91 = vld [vmem:[#allocation7 + $0xc] sm:$0xff]
    %v92 = vld [vmem:[#allocation7 + $0x14] sm:$0xf]
    %v93 = vld [vmem:[#allocation7 + $0x18] sm:$0xff]
    %v94 = vld [vmem:[#allocation7 + $0x20] sm:$0xf]
    %v95 = vld [vmem:[#allocation7 + $0x24] sm:$0xff]
    %v96 = vld [vmem:[#allocation7 + $0x2c] sm:$0xf]
    %v97 = vld [vmem:[#allocation7 + $0x30] sm:$0xff]
    %v98 = vld [vmem:[#allocation7 + $0x3c] sm:$0xff]
    %v99 = vld [vmem:[#allocation7 + $0x48] sm:$0xff]
    %v100 = vld [vmem:[#allocation7 + $0x54] sm:$0xff]
    %v101 = vld [vmem:[#allocation7 + $0x60] sm:$0xf]
    %v102 = vld [vmem:[#allocation7 + $0x6c] sm:$0xf]
    %v103 = vld [vmem:[#allocation7 + $0x78] sm:$0xf]
    %v104 = vld [vmem:[#allocation7 + $0x84] sm:$0xf]
    %v105 = vld [vmem:[#allocation7 + $0x90] sm:$0xf]
    %v106 = vld [vmem:[#allocation7 + $0x9c] sm:$0xf]
    %v107 = vld [vmem:[#allocation7 + $0xa8] sm:$0xf]
    %v108 = vld [vmem:[#allocation7 + $0xb4] sm:$0xf]
    %v109 = vld [vmem:[#allocation7 + $0xc0] sm:$0xf]
    %v110 = vld [vmem:[#allocation7 + $0xcc] sm:$0xf]
    %v111 = vld [vmem:[#allocation7 + $0xd8] sm:$0xf]
    %v112 = vld [vmem:[#allocation7 + $0xe4] sm:$0xf]
    %v113 = vld [vmem:[#allocation7 + $0xf0] sm:$0xf]
    %v114 = vld [vmem:[#allocation7 + $0xfc] sm:$0xf]
    %v115 = vld [vmem:[#allocation7 + $0x108] sm:$0xf]
    %v116 = vld [vmem:[#allocation7 + $0x114] sm:$0xf]
    %v117 = vld [vmem:[#allocation7 + $0x120] sm:$0xf]
    %v118 = vld [vmem:[#allocation7 + $0x12c] sm:$0xf]
    %v119 = vld [vmem:[#allocation7 + $0x138] sm:$0xf]
    %v120 = vld [vmem:[#allocation7 + $0x144] sm:$0xf]
    %v121 = vmul.f32 %v57, %v57
    %v122 = vmul.f32 %v58, %v58
    %vm123 = vcmask 261120
    %v124 = vsel %vm123, %v121, 0.0
    %125 = vadd.xlane.f32.xlu0 %v124
    %v126 = vpop.xlane.xlu0 %125
    %v127 = vsel %vm123, %v122, 0.0
    %128 = vadd.xlane.f32.xlu0 %v127
    %v129 = vpop.xlane.xlu0 %128
    %v130 = vrcp.pop 32.0
    %v131 = vmul.f32 %v126, %v130
    %v132 = vmul.f32 %v129, %v130
    %v133 = vadd.f32 %v131, 1e-06
    %v134 = vadd.f32 %v132, 1e-06
    %v135 = vrsqrt.pop %v133
    %v136 = vrsqrt.pop %v134
    %v137 = vmul.f32 %v57, %v135
    %v138 = vmul.f32 %v58, %v136
    %v139 = vmul.f32 %v137, %v81
    %v140 = vmul.f32 %v138, %v81
    %v141 = vpack.c.bf16 %v140, %v139
    %v143 = vlaneseq
    %v144 = vshrl.u32 %v143, 7
    %v145 = vsub.s32 0, %v144
    %v146 = vrot.slane %v84, %v145
    %v147 = vlaneseq
    %v148 = vshrl.u32 %v147, 7
    %v149 = vsub.s32 1, %v148
    %v150 = vrot.slane %v84, %v149
    %v151 = vlaneseq
    %v152 = vshrl.u32 %v151, 7
    %v153 = vsub.s32 2, %v152
    %v154 = vrot.slane %v84, %v153
    %v166 = vunpack.c.l.b16 %v89
    %v167 = vunpack.c.h.b16 %v89
    %v168 = vunpack.c.l.b16 %v90
    %v169 = vunpack.c.l.b16 %v91
    %v170 = vunpack.c.h.b16 %v91
    %v171 = vunpack.c.l.b16 %v92
    %v172 = vunpack.c.l.b16 %v93
    %v173 = vunpack.c.h.b16 %v93
    %v174 = vunpack.c.l.b16 %v94
    %v175 = vunpack.c.l.b16 %v95
    %v176 = vunpack.c.h.b16 %v95
    %v177 = vunpack.c.l.b16 %v96
    %v178 = vpack.c.b16 %v169, %v166
    %v179 = vpack.c.b16 %v170, %v167
    %v180 = vpack.c.b16 %v171, %v168
    %v181 = vpack.c.b16 %v175, %v172
    %v182 = vpack.c.b16 %v176, %v173
    %v183 = vpack.c.b16 %v177, %v174
    %v191 = vsel %vm123, %v141, 0
    %193 = vmatprep.subr.bf16.mxu0 %v179
    %194 = vmatpush1.bf16.msra.mxu0 %v178
    %195 = vmatprep.subr.bf16.mxu0 %v182
    %196 = vmatpush1.bf16.msra.mxu0 %v181
    %197 = vmatprep.subr.bf16.mxu0 0
    %198 = vmatpush1.bf16.msra.mxu0 0
    %199 = vmatprep.subr.bf16.mxu0 0
    %200 = vmatpush1.bf16.msra.mxu0 0
    %201 = vmatprep.subr.bf16.mxu0 0
    %202 = vmatpush1.bf16.msra.mxu0 0
    %203 = vmatprep.subr.bf16.mxu0 0
    %204 = vmatpush1.bf16.msra.mxu0 0
    %205 = vmatprep.subr.bf16.mxu0 0
    %206 = vmatpush1.bf16.msra.mxu0 0
    %207 = vmatprep.subr.bf16.mxu0 0
    %208 = vmatpush1.bf16.msra.mxu0 0
    %209 = vmatprep.subr.bf16.mxu0 0
    %210 = vmatpush1.bf16.msra.mxu0 0
    %211 = vmatprep.subr.bf16.mxu0 0
    %212 = vmatpush1.bf16.msra.mxu0 0
    %213 = vmatprep.subr.bf16.mxu0 0
    %214 = vmatpush1.bf16.msra.mxu0 0
    %215 = vmatprep.subr.bf16.mxu0 0
    %216 = vmatpush1.bf16.msra.mxu0 0
    %217 = vmatprep.subr.bf16.mxu0 0
    %218 = vmatpush1.bf16.msra.mxu0 0
    %219 = vmatprep.subr.bf16.mxu0 0
    %220 = vmatpush1.bf16.msra.mxu0 0
    %221 = vmatprep.subr.bf16.mxu0 0
    %222 = vmatpush1.bf16.msra.mxu0 0
    %223 = vmatprep.subr.bf16.mxu0 0
    %224 = vmatpush1.bf16.msra.mxu0 0
    %225 = vmatprep.mubr.bf16.mxu0 0
    %226 = vmatmul.mubr.bf16.gmra.mrb[0].mxu0 %v191
    %v227 = vpop.f32.mrb[0].mxu0
    %v228 = vadd.f32 %v146, %v227
    %v229 = vpop.f32.mrb[0].mxu0
    %v230 = vadd.f32 %v150, %v229
    %v231 = vpop.f32.mrb[0].mxu0
    %v232 = vadd.f32 %v146, %v231
    %v233 = vpop.f32.mrb[0].mxu0
    %v234 = vadd.f32 %v150, %v233
    %235 = vdwg.mxu0
    %236 = vmatprep.subr.bf16.mxu0 0
    %237 = vmatpush1.bf16.msra.mxu0 %v180
    %238 = vmatprep.subr.bf16.mxu0 0
    %239 = vmatpush1.bf16.msra.mxu0 %v183
    %240 = vmatprep.subr.bf16.mxu0 0
    %241 = vmatpush1.bf16.msra.mxu0 0
    %242 = vmatprep.subr.bf16.mxu0 0
    %243 = vmatpush1.bf16.msra.mxu0 0
    %244 = vmatprep.subr.bf16.mxu0 0
    %245 = vmatpush1.bf16.msra.mxu0 0
    %246 = vmatprep.subr.bf16.mxu0 0
    %247 = vmatpush1.bf16.msra.mxu0 0
    %248 = vmatprep.subr.bf16.mxu0 0
    %249 = vmatpush1.bf16.msra.mxu0 0
    %250 = vmatprep.subr.bf16.mxu0 0
    %251 = vmatpush1.bf16.msra.mxu0 0
    %252 = vmatprep.subr.bf16.mxu0 0
    %253 = vmatpush1.bf16.msra.mxu0 0
    %254 = vmatprep.subr.bf16.mxu0 0
    %255 = vmatpush1.bf16.msra.mxu0 0
    %256 = vmatprep.subr.bf16.mxu0 0
    %257 = vmatpush1.bf16.msra.mxu0 0
    %258 = vmatprep.subr.bf16.mxu0 0
    %259 = vmatpush1.bf16.msra.mxu0 0
    %260 = vmatprep.subr.bf16.mxu0 0
    %261 = vmatpush1.bf16.msra.mxu0 0
    %262 = vmatprep.subr.bf16.mxu0 0
    %263 = vmatpush1.bf16.msra.mxu0 0
    %264 = vmatprep.subr.bf16.mxu0 0
    %265 = vmatpush1.bf16.msra.mxu0 0
    %266 = vmatprep.subr.bf16.mxu0 0
    %267 = vmatpush1.bf16.msra.mxu0 0
    %268 = vmatprep.mubr.bf16.mxu0 0
    %269 = vmatmul.mubr.bf16.gmra.mrb[0].mxu0 %v191
    %v270 = vpop.f32.mrb[0].mxu0
    %v271 = vadd.f32 %v154, %v270
    %v272 = vpop.f32.mrb[0].mxu0
    %v273 = vpop.f32.mrb[0].mxu0
    %v274 = vadd.f32 %v154, %v273
    %v275 = vpop.f32.mrb[0].mxu0
    %276 = vdwg.mxu0
    %v277 = vmul.f32 %v228, %v59
    %v278 = vmul.f32 %v232, %v60
    %vm279 = vcmask 1047808
    %280 = vrot.lane.b32.xlu0 %v228, 32
    %v281 = vpop.permute.xlu0 %280
    %v282 = vsel %vm279, %v281, %v228
    %283 = vrot.lane.b32.xlu0 %v232, 32
    %v284 = vpop.permute.xlu0 %283
    %v285 = vsel %vm279, %v284, %v232
    %286 = vrot.lane.b32.xlu0 %v282, 32
    %v287 = vpop.permute.xlu0 %286
    %288 = vrot.lane.b32.xlu0 %v285, 32
    %v289 = vpop.permute.xlu0 %288
    %v290 = vsel %vm279, %v287, %v228
    %v291 = vsel %vm279, %v289, %v232
    %294 = vrot.lane.b32.xlu0 %v61, 1
    %v295 = vpop.permute.xlu0 %294
    %296 = vrot.lane.b32.xlu0 %v62, 1
    %v297 = vpop.permute.xlu0 %296
    %v300 = vmul.f32 %v290, %v295
    %v301 = vmul.f32 %v291, %v297
    %304 = vrot.lane.b32.xlu0 %v300, 127
    %v305 = vpop.permute.xlu0 %304
    %306 = vrot.lane.b32.xlu0 %v301, 127
    %v307 = vpop.permute.xlu0 %306
    %v310 = vadd.f32 %v277, %v305
    %v311 = vadd.f32 %v278, %v307
    %314 = vrot.lane.b32.xlu0 %v63, 31
    %v315 = vpop.permute.xlu0 %314
    %316 = vrot.lane.b32.xlu0 %v64, 31
    %v317 = vpop.permute.xlu0 %316
    %v320 = vmul.f32 %v290, %v315
    %v321 = vmul.f32 %v291, %v317
    %324 = vrot.lane.b32.xlu0 %v320, 97
    %v325 = vpop.permute.xlu0 %324
    %326 = vrot.lane.b32.xlu0 %v321, 97
    %v327 = vpop.permute.xlu0 %326
    %v330 = vadd.f32 %v310, %v325
    %v331 = vadd.f32 %v311, %v327
    %v332 = vmul.f32 %v230, %v59
    %v333 = vmul.f32 %v234, %v60
    %334 = vrot.lane.b32.xlu0 %v230, 32
    %v335 = vpop.permute.xlu0 %334
    %v336 = vsel %vm279, %v335, %v230
    %337 = vrot.lane.b32.xlu0 %v234, 32
    %v338 = vpop.permute.xlu0 %337
    %v339 = vsel %vm279, %v338, %v234
    %340 = vrot.lane.b32.xlu0 %v336, 32
    %v341 = vpop.permute.xlu0 %340
    %342 = vrot.lane.b32.xlu0 %v339, 32
    %v343 = vpop.permute.xlu0 %342
    %v344 = vsel %vm279, %v341, %v230
    %v345 = vsel %vm279, %v343, %v234
    %v346 = vmul.f32 %v344, %v295
    %v347 = vmul.f32 %v345, %v297
    %350 = vrot.lane.b32.xlu0 %v346, 127
    %v351 = vpop.permute.xlu0 %350
    %352 = vrot.lane.b32.xlu0 %v347, 127
    %v353 = vpop.permute.xlu0 %352
    %v356 = vadd.f32 %v332, %v351
    %v357 = vadd.f32 %v333, %v353
    %v358 = vmul.f32 %v344, %v315
    %v359 = vmul.f32 %v345, %v317
    %362 = vrot.lane.b32.xlu0 %v358, 97
    %v363 = vpop.permute.xlu0 %362
    %364 = vrot.lane.b32.xlu0 %v359, 97
    %v365 = vpop.permute.xlu0 %364
    %v368 = vadd.f32 %v356, %v363
    %v369 = vadd.f32 %v357, %v365
    %v370 = vmul.f32 %v330, %v73
    %v371 = vmul.f32 %v331, %v74
    %v372 = vmul.f32 %v330, %v75
    %v373 = vmul.f32 %v331, %v76
    %v374 = vmul.f32 %v330, %v77
    %v375 = vmul.f32 %v331, %v78
    %v376 = vmul.f32 %v330, %v79
    %v377 = vmul.f32 %v331, %v80
    %v378 = vpack.c.bf16 %v371, %v370
    %v379 = vpack.c.bf16 %v373, %v372
    %v380 = vpack.c.bf16 %v375, %v374
    %v381 = vpack.c.bf16 %v377, %v376
    %v382 = vpack.c.bf16 %v369, %v368
    %v384 = vsel %vm123, %v378, 0
    %v387 = vsel %vm123, %v379, 0
    %v390 = vsel %vm123, %v380, 0
    %v393 = vsel %vm123, %v381, 0
    %v396 = vsel %vm123, %v382, 0
    %398 = vmatprep.subr.bf16.mxu0 0
    %399 = vmatpush1.bf16.xpose.msra.mxu0 %v396
    %400 = vmatprep.subr.bf16.mxu0 0
    %401 = vmatpush1.bf16.xpose.msra.mxu0 0
    %402 = vmatprep.subr.bf16.mxu0 0
    %403 = vmatpush1.bf16.xpose.msra.mxu0 0
    %404 = vmatprep.subr.bf16.mxu0 0
    %405 = vmatpush1.bf16.xpose.msra.mxu0 0
    %406 = vmatprep.subr.bf16.mxu0 0
    %407 = vmatpush1.bf16.xpose.msra.mxu0 0
    %408 = vmatprep.subr.bf16.mxu0 0
    %409 = vmatpush1.bf16.xpose.msra.mxu0 0
    %410 = vmatprep.subr.bf16.mxu0 0
    %411 = vmatpush1.bf16.xpose.msra.mxu0 0
    %412 = vmatprep.subr.bf16.mxu0 0
    %413 = vmatpush1.bf16.xpose.msra.mxu0 0
    %414 = vmatprep.subr.bf16.mxu0 0
    %415 = vmatpush1.bf16.xpose.msra.mxu0 0
    %416 = vmatprep.subr.bf16.mxu0 0
    %417 = vmatpush1.bf16.xpose.msra.mxu0 0
    %418 = vmatprep.subr.bf16.mxu0 0
    %419 = vmatpush1.bf16.xpose.msra.mxu0 0
    %420 = vmatprep.subr.bf16.mxu0 0
    %421 = vmatpush1.bf16.xpose.msra.mxu0 0
    %422 = vmatprep.subr.bf16.mxu0 0
    %423 = vmatpush1.bf16.xpose.msra.mxu0 0
    %424 = vmatprep.subr.bf16.mxu0 0
    %425 = vmatpush1.bf16.xpose.msra.mxu0 0
    %426 = vmatprep.subr.bf16.mxu0 0
    %427 = vmatpush1.bf16.xpose.msra.mxu0 0
    %428 = vmatprep.subr.bf16.mxu0 0
    %429 = vmatpush1.bf16.xpose.msra.mxu0 0
    %430 = vmatprep.mubr.bf16.mxu0 0
    %431 = vmatmul.mubr.bf16.gmra.mrb[0].mxu0 %v384
    %v432 = vpop.f32.mrb[0].mxu0
    %v433 = vadd.f32 %v65, %v432
    %v434 = vpop.f32.mrb[0].mxu0
    %v435 = vpop.f32.mrb[0].mxu0
    %v436 = vadd.f32 %v66, %v435
    %v437 = vpop.f32.mrb[0].mxu0
    %438 = vmatprep.mubr.bf16.mxu0 0
    %439 = vmatmul.mubr.bf16.gmra.mrb[0].mxu0 %v387
    %v440 = vpop.f32.mrb[0].mxu0
    %v441 = vadd.f32 %v67, %v440
    %v442 = vpop.f32.mrb[0].mxu0
    %v443 = vpop.f32.mrb[0].mxu0
    %v444 = vadd.f32 %v68, %v443
    %v445 = vpop.f32.mrb[0].mxu0
    %446 = vmatprep.mubr.bf16.mxu0 0
    %447 = vmatmul.mubr.bf16.gmra.mrb[0].mxu0 %v390
    %v448 = vpop.f32.mrb[0].mxu0
    %v449 = vadd.f32 %v69, %v448
    %v450 = vpop.f32.mrb[0].mxu0
    %v451 = vpop.f32.mrb[0].mxu0
    %v452 = vadd.f32 %v70, %v451
    %v453 = vpop.f32.mrb[0].mxu0
    %454 = vmatprep.mubr.bf16.mxu0 0
    %455 = vmatmul.mubr.bf16.gmra.mrb[0].mxu0 %v393
    %v456 = vpop.f32.mrb[0].mxu0
    %v457 = vadd.f32 %v71, %v456
    %v458 = vpop.f32.mrb[0].mxu0
    %v459 = vpop.f32.mrb[0].mxu0
    %v460 = vadd.f32 %v72, %v459
    %v461 = vpop.f32.mrb[0].mxu0
    %462 = vdwg.mxu0
    %vm463 = vcmask 130048
    %v464 = vsel %vm463, %v433, -inf
    %465 = vmax.xlane.f32.xlu0 %v464
    %v466 = vpop.xlane.xlu0 %465
    %v467 = vsel %vm463, %v436, -inf
    %468 = vmax.xlane.f32.xlu0 %v467
    %v469 = vpop.xlane.xlu0 %468
    %v470 = vsel %vm463, %v441, -inf
    %471 = vmax.xlane.f32.xlu0 %v470
    %v472 = vpop.xlane.xlu0 %471
    %v473 = vsel %vm463, %v444, -inf
    %474 = vmax.xlane.f32.xlu0 %v473
    %v475 = vpop.xlane.xlu0 %474
    %v476 = vsel %vm463, %v449, -inf
    %477 = vmax.xlane.f32.xlu0 %v476
    %v478 = vpop.xlane.xlu0 %477
    %v479 = vsel %vm463, %v452, -inf
    %480 = vmax.xlane.f32.xlu0 %v479
    %v481 = vpop.xlane.xlu0 %480
    %v482 = vsel %vm463, %v457, -inf
    %483 = vmax.xlane.f32.xlu0 %v482
    %v484 = vpop.xlane.xlu0 %483
    %v485 = vsel %vm463, %v460, -inf
    %486 = vmax.xlane.f32.xlu0 %v485
    %v487 = vpop.xlane.xlu0 %486
    %v488 = vsub.f32 %v433, %v466
    %v489 = vsub.f32 %v436, %v469
    %v490 = vsub.f32 %v441, %v472
    %v491 = vsub.f32 %v444, %v475
    %v492 = vsub.f32 %v449, %v478
    %v493 = vsub.f32 %v452, %v481
    %v494 = vsub.f32 %v457, %v484
    %v495 = vsub.f32 %v460, %v487
    %v496 = vmul.f32 %v488, 1.442695
    %v497 = vpow.pop %v496
    %v498 = vmul.f32 %v489, 1.442695
    %v499 = vpow.pop %v498
    %v500 = vmul.f32 %v490, 1.442695
    %v501 = vpow.pop %v500
    %v502 = vmul.f32 %v491, 1.442695
    %v503 = vpow.pop %v502
    %v504 = vmul.f32 %v492, 1.442695
    %v505 = vpow.pop %v504
    %v506 = vmul.f32 %v493, 1.442695
    %v507 = vpow.pop %v506
    %v508 = vmul.f32 %v494, 1.442695
    %v509 = vpow.pop %v508
    %v510 = vmul.f32 %v495, 1.442695
    %v511 = vpow.pop %v510
    %v512 = vsel %vm463, %v497, 0.0
    %513 = vadd.xlane.f32.xlu0 %v512
    %v514 = vpop.xlane.xlu0 %513
    %v515 = vsel %vm463, %v499, 0.0
    %516 = vadd.xlane.f32.xlu0 %v515
    %v517 = vpop.xlane.xlu0 %516
    %v518 = vsel %vm463, %v501, 0.0
    %519 = vadd.xlane.f32.xlu0 %v518
    %v520 = vpop.xlane.xlu0 %519
    %v521 = vsel %vm463, %v503, 0.0
    %522 = vadd.xlane.f32.xlu0 %v521
    %v523 = vpop.xlane.xlu0 %522
    %v524 = vsel %vm463, %v505, 0.0
    %525 = vadd.xlane.f32.xlu0 %v524
    %v526 = vpop.xlane.xlu0 %525
    %v527 = vsel %vm463, %v507, 0.0
    %528 = vadd.xlane.f32.xlu0 %v527
    %v529 = vpop.xlane.xlu0 %528
    %v530 = vsel %vm463, %v509, 0.0
    %531 = vadd.xlane.f32.xlu0 %v530
    %v532 = vpop.xlane.xlu0 %531
    %v533 = vsel %vm463, %v511, 0.0
    %534 = vadd.xlane.f32.xlu0 %v533
    %v535 = vpop.xlane.xlu0 %534
    %v536 = vrcp.pop %v514
    %v537 = vrcp.pop %v517
    %v538 = vrcp.pop %v520
    %v539 = vrcp.pop %v523
    %v540 = vrcp.pop %v526
    %v541 = vrcp.pop %v529
    %v542 = vrcp.pop %v532
    %v543 = vrcp.pop %v535
    %v544 = vmul.f32 %v497, %v536
    %v545 = vmul.f32 %v499, %v537
    %v546 = vmul.f32 %v501, %v538
    %v547 = vmul.f32 %v503, %v539
    %v548 = vmul.f32 %v505, %v540
    %v549 = vmul.f32 %v507, %v541
    %v550 = vmul.f32 %v509, %v542
    %v551 = vmul.f32 %v511, %v543
    %v552 = vpack.c.bf16 %v545, %v544
    %v553 = vpack.c.bf16 %v547, %v546
    %v554 = vpack.c.bf16 %v549, %v548
    %v555 = vpack.c.bf16 %v551, %v550
    %v556 = vpack.c.bf16 %v274, %v271
    %v558 = vsel %vm463, %v552, 0
    %v561 = vsel %vm463, %v553, 0
    %v564 = vsel %vm463, %v554, 0
    %v567 = vsel %vm463, %v555, 0
    %569 = vmatprep.subr.bf16.mxu0 0
    %570 = vmatpush1.bf16.msra.mxu0 %v556
    %571 = vmatprep.subr.bf16.mxu0 0
    %572 = vmatpush1.bf16.msra.mxu0 0
    %573 = vmatprep.subr.bf16.mxu0 0
    %574 = vmatpush1.bf16.msra.mxu0 0
    %575 = vmatprep.subr.bf16.mxu0 0
    %576 = vmatpush1.bf16.msra.mxu0 0
    %577 = vmatprep.subr.bf16.mxu0 0
    %578 = vmatpush1.bf16.msra.mxu0 0
    %579 = vmatprep.subr.bf16.mxu0 0
    %580 = vmatpush1.bf16.msra.mxu0 0
    %581 = vmatprep.subr.bf16.mxu0 0
    %582 = vmatpush1.bf16.msra.mxu0 0
    %583 = vmatprep.subr.bf16.mxu0 0
    %584 = vmatpush1.bf16.msra.mxu0 0
    %585 = vmatprep.subr.bf16.mxu0 0
    %586 = vmatpush1.bf16.msra.mxu0 0
    %587 = vmatprep.subr.bf16.mxu0 0
    %588 = vmatpush1.bf16.msra.mxu0 0
    %589 = vmatprep.subr.bf16.mxu0 0
    %590 = vmatpush1.bf16.msra.mxu0 0
    %591 = vmatprep.subr.bf16.mxu0 0
    %592 = vmatpush1.bf16.msra.mxu0 0
    %593 = vmatprep.subr.bf16.mxu0 0
    %594 = vmatpush1.bf16.msra.mxu0 0
    %595 = vmatprep.subr.bf16.mxu0 0
    %596 = vmatpush1.bf16.msra.mxu0 0
    %597 = vmatprep.subr.bf16.mxu0 0
    %598 = vmatpush1.bf16.msra.mxu0 0
    %599 = vmatprep.subr.bf16.mxu0 0
    %600 = vmatpush1.bf16.msra.mxu0 0
    %601 = vmatprep.mubr.bf16.mxu0 0
    %602 = vmatmul.mubr.bf16.gmra.mrb[0].mxu0 %v558
    %v603 = vpop.f32.mrb[0].mxu0
    %v604 = vadd.f32 0.0, %v603
    %v605 = vpop.f32.mrb[0].mxu0
    %v606 = vpop.f32.mrb[0].mxu0
    %v607 = vadd.f32 0.0, %v606
    %v608 = vpop.f32.mrb[0].mxu0
    %609 = vmatprep.mubr.bf16.mxu0 0
    %610 = vmatmul.mubr.bf16.gmra.mrb[0].mxu0 %v561
    %v611 = vpop.f32.mrb[0].mxu0
    %v612 = vadd.f32 0.0, %v611
    %v613 = vpop.f32.mrb[0].mxu0
    %v614 = vpop.f32.mrb[0].mxu0
    %v615 = vadd.f32 0.0, %v614
    %v616 = vpop.f32.mrb[0].mxu0
    %617 = vmatprep.mubr.bf16.mxu0 0
    %618 = vmatmul.mubr.bf16.gmra.mrb[0].mxu0 %v564
    %v619 = vpop.f32.mrb[0].mxu0
    %v620 = vadd.f32 0.0, %v619
    %v621 = vpop.f32.mrb[0].mxu0
    %v622 = vpop.f32.mrb[0].mxu0
    %v623 = vadd.f32 0.0, %v622
    %v624 = vpop.f32.mrb[0].mxu0
    %625 = vmatprep.mubr.bf16.mxu0 0
    %626 = vmatmul.mubr.bf16.gmra.mrb[0].mxu0 %v567
    %v627 = vpop.f32.mrb[0].mxu0
    %v628 = vadd.f32 0.0, %v627
    %v629 = vpop.f32.mrb[0].mxu0
    %v630 = vpop.f32.mrb[0].mxu0
    %v631 = vadd.f32 0.0, %v630
    %v632 = vpop.f32.mrb[0].mxu0
    %633 = vdwg.mxu0
    %v634 = vmul.f32 %v604, %v73
    %v635 = vmul.f32 %v607, %v74
    %v636 = vmul.f32 %v612, %v75
    %v637 = vmul.f32 %v615, %v76
    %v638 = vmul.f32 %v620, %v77
    %v639 = vmul.f32 %v623, %v78
    %v640 = vmul.f32 %v628, %v79
    %v641 = vmul.f32 %v631, %v80
    %v642 = vadd.f32 %v634, %v636
    %v643 = vadd.f32 %v635, %v637
    %v644 = vadd.f32 %v642, %v638
    %v645 = vadd.f32 %v643, %v639
    %v646 = vadd.f32 %v644, %v640
    %v647 = vadd.f32 %v645, %v641
    %v648 = vpack.c.bf16 %v647, %v646
    %v653 = vunpack.c.l.b16 %v101
    %v654 = vunpack.c.l.b16 %v102
    %v655 = vunpack.c.l.b16 %v103
    %v656 = vunpack.c.l.b16 %v104
    %v657 = vpack.c.b16 %v654, %v653
    %v658 = vpack.c.b16 %v656, %v655
    %v662 = vsel %vm123, %v648, 0
    %664 = vmatprep.subr.bf16.mxu0 0
    %665 = vmatpush1.bf16.msra.mxu0 %v657
    %666 = vmatprep.subr.bf16.mxu0 0
    %667 = vmatpush1.bf16.msra.mxu0 %v658
    %668 = vmatprep.subr.bf16.mxu0 0
    %669 = vmatpush1.bf16.msra.mxu0 0
    %670 = vmatprep.subr.bf16.mxu0 0
    %671 = vmatpush1.bf16.msra.mxu0 0
    %672 = vmatprep.subr.bf16.mxu0 0
    %673 = vmatpush1.bf16.msra.mxu0 0
    %674 = vmatprep.subr.bf16.mxu0 0
    %675 = vmatpush1.bf16.msra.mxu0 0
    %676 = vmatprep.subr.bf16.mxu0 0
    %677 = vmatpush1.bf16.msra.mxu0 0
    %678 = vmatprep.subr.bf16.mxu0 0
    %679 = vmatpush1.bf16.msra.mxu0 0
    %680 = vmatprep.subr.bf16.mxu0 0
    %681 = vmatpush1.bf16.msra.mxu0 0
    %682 = vmatprep.subr.bf16.mxu0 0
    %683 = vmatpush1.bf16.msra.mxu0 0
    %684 = vmatprep.subr.bf16.mxu0 0
    %685 = vmatpush1.bf16.msra.mxu0 0
    %686 = vmatprep.subr.bf16.mxu0 0
    %687 = vmatpush1.bf16.msra.mxu0 0
    %688 = vmatprep.subr.bf16.mxu0 0
    %689 = vmatpush1.bf16.msra.mxu0 0
    %690 = vmatprep.subr.bf16.mxu0 0
    %691 = vmatpush1.bf16.msra.mxu0 0
    %692 = vmatprep.subr.bf16.mxu0 0
    %693 = vmatpush1.bf16.msra.mxu0 0
    %694 = vmatprep.subr.bf16.mxu0 0
    %695 = vmatpush1.bf16.msra.mxu0 0
    %696 = vmatprep.mubr.bf16.mxu0 0
    %697 = vmatmul.mubr.bf16.gmra.mrb[0].mxu0 %v662
    %v698 = vpop.f32.mrb[0].mxu0
    %v699 = vadd.f32 0.0, %v698
    %v700 = vpop.f32.mrb[0].mxu0
    %v701 = vpop.f32.mrb[0].mxu0
    %v702 = vadd.f32 0.0, %v701
    %v703 = vpop.f32.mrb[0].mxu0
    %704 = vdwg.mxu0
    %v705 = vadd.f32 %v57, %v699
    %v706 = vadd.f32 %v58, %v702
    %v707 = vadd.f32 %v705, %v85
    %v708 = vadd.f32 %v706, %v85
    %v709 = vmul.f32 %v707, %v707
    %v710 = vmul.f32 %v708, %v708
    %v711 = vsel %vm123, %v709, 0.0
    %712 = vadd.xlane.f32.xlu0 %v711
    %v713 = vpop.xlane.xlu0 %712
    %v714 = vsel %vm123, %v710, 0.0
    %715 = vadd.xlane.f32.xlu0 %v714
    %v716 = vpop.xlane.xlu0 %715
    %v717 = vmul.f32 %v713, %v130
    %v718 = vmul.f32 %v716, %v130
    %v719 = vadd.f32 %v717, 1e-06
    %v720 = vadd.f32 %v718, 1e-06
    %v721 = vrsqrt.pop %v719
    %v722 = vrsqrt.pop %v720
    %v723 = vmul.f32 %v707, %v721
    %v724 = vmul.f32 %v708, %v722
    %v725 = vmul.f32 %v723, %v82
    %v726 = vmul.f32 %v724, %v82
    %v727 = vpack.c.bf16 %v726, %v725
    %v729 = vlaneseq
    %v730 = vshrl.u32 %v729, 7
    %v731 = vsub.s32 0, %v730
    %v732 = vrot.slane %v87, %v731
    %v733 = vlaneseq
    %v734 = vshrl.u32 %v733, 7
    %v735 = vsub.s32 1, %v734
    %v736 = vrot.slane %v87, %v735
    %v743 = vunpack.c.l.b16 %v97
    %v744 = vunpack.c.h.b16 %v97
    %v745 = vunpack.c.l.b16 %v98
    %v746 = vunpack.c.h.b16 %v98
    %v747 = vunpack.c.l.b16 %v99
    %v748 = vunpack.c.h.b16 %v99
    %v749 = vunpack.c.l.b16 %v100
    %v750 = vunpack.c.h.b16 %v100
    %v751 = vpack.c.b16 %v745, %v743
    %v752 = vpack.c.b16 %v746, %v744
    %v753 = vpack.c.b16 %v749, %v747
    %v754 = vpack.c.b16 %v750, %v748
    %v760 = vsel %vm123, %v727, 0
    %762 = vmatprep.subr.bf16.mxu0 %v752
    %763 = vmatpush1.bf16.msra.mxu0 %v751
    %764 = vmatprep.subr.bf16.mxu0 %v754
    %765 = vmatpush1.bf16.msra.mxu0 %v753
    %766 = vmatprep.subr.bf16.mxu0 0
    %767 = vmatpush1.bf16.msra.mxu0 0
    %768 = vmatprep.subr.bf16.mxu0 0
    %769 = vmatpush1.bf16.msra.mxu0 0
    %770 = vmatprep.subr.bf16.mxu0 0
    %771 = vmatpush1.bf16.msra.mxu0 0
    %772 = vmatprep.subr.bf16.mxu0 0
    %773 = vmatpush1.bf16.msra.mxu0 0
    %774 = vmatprep.subr.bf16.mxu0 0
    %775 = vmatpush1.bf16.msra.mxu0 0
    %776 = vmatprep.subr.bf16.mxu0 0
    %777 = vmatpush1.bf16.msra.mxu0 0
    %778 = vmatprep.subr.bf16.mxu0 0
    %779 = vmatpush1.bf16.msra.mxu0 0
    %780 = vmatprep.subr.bf16.mxu0 0
    %781 = vmatpush1.bf16.msra.mxu0 0
    %782 = vmatprep.subr.bf16.mxu0 0
    %783 = vmatpush1.bf16.msra.mxu0 0
    %784 = vmatprep.subr.bf16.mxu0 0
    %785 = vmatpush1.bf16.msra.mxu0 0
    %786 = vmatprep.subr.bf16.mxu0 0
    %787 = vmatpush1.bf16.msra.mxu0 0
    %788 = vmatprep.subr.bf16.mxu0 0
    %789 = vmatpush1.bf16.msra.mxu0 0
    %790 = vmatprep.subr.bf16.mxu0 0
    %791 = vmatpush1.bf16.msra.mxu0 0
    %792 = vmatprep.subr.bf16.mxu0 0
    %793 = vmatpush1.bf16.msra.mxu0 0
    %794 = vmatprep.mubr.bf16.mxu0 0
    %795 = vmatmul.mubr.bf16.gmra.mrb[0].mxu0 %v760
    %v796 = vpop.f32.mrb[0].mxu0
    %v797 = vadd.f32 %v732, %v796
    %v798 = vpop.f32.mrb[0].mxu0
    %v799 = vadd.f32 %v736, %v798
    %v800 = vpop.f32.mrb[0].mxu0
    %v801 = vadd.f32 %v732, %v800
    %v802 = vpop.f32.mrb[0].mxu0
    %v803 = vadd.f32 %v736, %v802
    %804 = vdwg.mxu0
    %v805 = vxor.u32 %v797, 2147483648
    %v806 = vxor.u32 %v801, 2147483648
    %v807 = vmul.f32 %v805, 1.442695
    %v808 = vpow.pop %v807
    %v809 = vmul.f32 %v806, 1.442695
    %v810 = vpow.pop %v809
    %v811 = vadd.f32 %v808, 1.0
    %v812 = vadd.f32 %v810, 1.0
    %v813 = vrcp.pop %v811
    %v814 = vmul.f32 1.0, %v813
    %v815 = vrcp.pop %v812
    %v816 = vmul.f32 1.0, %v815
    %v817 = vmul.f32 %v797, %v814
    %v818 = vmul.f32 %v801, %v816
    %v819 = vmul.f32 %v817, %v799
    %v820 = vmul.f32 %v818, %v803
    %v821 = vpack.c.bf16 %v820, %v819
    %v838 = vunpack.c.l.b16 %v105
    %v839 = vunpack.c.l.b16 %v106
    %v840 = vunpack.c.l.b16 %v107
    %v841 = vunpack.c.l.b16 %v108
    %v842 = vunpack.c.l.b16 %v109
    %v843 = vunpack.c.l.b16 %v110
    %v844 = vunpack.c.l.b16 %v111
    %v845 = vunpack.c.l.b16 %v112
    %v846 = vunpack.c.l.b16 %v113
    %v847 = vunpack.c.l.b16 %v114
    %v848 = vunpack.c.l.b16 %v115
    %v849 = vunpack.c.l.b16 %v116
    %v850 = vunpack.c.l.b16 %v117
    %v851 = vunpack.c.l.b16 %v118
    %v852 = vunpack.c.l.b16 %v119
    %v853 = vunpack.c.l.b16 %v120
    %v854 = vpack.c.b16 %v839, %v838
    %v855 = vpack.c.b16 %v841, %v840
    %v856 = vpack.c.b16 %v843, %v842
    %v857 = vpack.c.b16 %v845, %v844
    %v858 = vpack.c.b16 %v847, %v846
    %v859 = vpack.c.b16 %v849, %v848
    %v860 = vpack.c.b16 %v851, %v850
    %v861 = vpack.c.b16 %v853, %v852
    %870 = vmatprep.subr.bf16.mxu0 0
    %871 = vmatpush1.bf16.msra.mxu0 %v854
    %872 = vmatprep.subr.bf16.mxu0 0
    %873 = vmatpush1.bf16.msra.mxu0 %v855
    %874 = vmatprep.subr.bf16.mxu0 0
    %875 = vmatpush1.bf16.msra.mxu0 %v856
    %876 = vmatprep.subr.bf16.mxu0 0
    %877 = vmatpush1.bf16.msra.mxu0 %v857
    %878 = vmatprep.subr.bf16.mxu0 0
    %879 = vmatpush1.bf16.msra.mxu0 %v858
    %880 = vmatprep.subr.bf16.mxu0 0
    %881 = vmatpush1.bf16.msra.mxu0 %v859
    %882 = vmatprep.subr.bf16.mxu0 0
    %883 = vmatpush1.bf16.msra.mxu0 %v860
    %884 = vmatprep.subr.bf16.mxu0 0
    %885 = vmatpush1.bf16.msra.mxu0 %v861
    %886 = vmatprep.subr.bf16.mxu0 0
    %887 = vmatpush1.bf16.msra.mxu0 0
    %888 = vmatprep.subr.bf16.mxu0 0
    %889 = vmatpush1.bf16.msra.mxu0 0
    %890 = vmatprep.subr.bf16.mxu0 0
    %891 = vmatpush1.bf16.msra.mxu0 0
    %892 = vmatprep.subr.bf16.mxu0 0
    %893 = vmatpush1.bf16.msra.mxu0 0
    %894 = vmatprep.subr.bf16.mxu0 0
    %895 = vmatpush1.bf16.msra.mxu0 0
    %896 = vmatprep.subr.bf16.mxu0 0
    %897 = vmatpush1.bf16.msra.mxu0 0
    %898 = vmatprep.subr.bf16.mxu0 0
    %899 = vmatpush1.bf16.msra.mxu0 0
    %900 = vmatprep.subr.bf16.mxu0 0
    %901 = vmatpush1.bf16.msra.mxu0 0
    %902 = vmatprep.mubr.bf16.mxu0 0
    %903 = vmatmul.mubr.bf16.gmra.mrb[0].mxu0 %v821
    %v904 = vpop.f32.mrb[0].mxu0
    %v905 = vadd.f32 %v88, %v904
    %v906 = vpop.f32.mrb[0].mxu0
    %v907 = vpop.f32.mrb[0].mxu0
    %v908 = vadd.f32 %v88, %v907
    %v909 = vpop.f32.mrb[0].mxu0
    %910 = vdwg.mxu0
    %v911 = vadd.f32 %v707, %v905
    %v912 = vadd.f32 %v708, %v908
    %913 = vst.msk [vmem:[#allocation8] sm:$0xff] %vm123, %v911
    %914 = vst.msk [vmem:[#allocation8 + $0x8] sm:$0xff] %vm123, %v912
    // Predicated region
    $region26: #{_encoder_layer_call.1} parent=1 // pred_check
      _
    $region27: #{_encoder_layer_call.1} parent=1 // pred_check_branch
      %916 = sbr.rel (0) target = $region29
    $region28: #{_encoder_layer_call.1} parent=1 // pred_region
      %s918 = ssub.s32 256, 256
      %919 = vsyncadd [#allocation4], %s918
      %s920 = sshll.u32 [#allocation8], 4
      %s921 = int_to_ptr.vmem [resolvable:$true] %s920
      %926 = dma.vmem_to_hbm [thread:$0]  %s921, 256, %s3, [#allocation4], 128, 128, 8
    $region29: #{_encoder_layer_call.1} parent=1 // pred_fallthru
      _
    // Predicated region
    $region30: #{_encoder_layer_call.1} parent=1 // pred_check
      _
    $region31: #{_encoder_layer_call.1} parent=1 // pred_check_branch
      %928 = sbr.rel (0) target = $region33
    $region32: #{_encoder_layer_call.1} parent=1 // pred_region
      %929 = dma.done [#allocation4], 256
    $region33: #{_encoder_layer_call.1} parent=1 // pred_fallthru
      _
    %930 = vsyncpa [#allocation3], 1
    %931 = vsyncpa [#allocation6], 1
    %932 = vsyncpa [#allocation4], 1

</llo_original>
